<compile_context>
chip_gen: v7x
topology: tpu7x:2x2x1
jax: 0.10.0
libtpu: 0.0.40
codegen_flags: <defaults>
</compile_context>

<pallas_src>
from functools import partial

import jax
import jax.numpy as jnp
from jax.experimental import pallas as pl
from jax.experimental.pallas import tpu as pltpu


# --------------------------------------------------------------------------- #
# Kernel: one lane-dense pointwise matmul  W(C_out,C_in) @ X(C_in,TL) + bias.
# Shared by the native-layout path (batch dim squeezed out of the block) and
# the batch-collapsed fallback path — the block shapes seen in-kernel match.
# --------------------------------------------------------------------------- #
def pointwise_conv_kernel(w_ref, b_ref, x_ref, o_ref):
    # w_ref: (C_out, C_in)   resident weight (kernel_size squeezed out)
    # b_ref: (C_out, 1)      f32 bias, broadcast over the lane axis
    # x_ref: (C_in, TL)      lane-dense input tile
    # o_ref: (C_out, TL)     matching output tile
    y = jnp.dot(w_ref[...], x_ref[...], preferred_element_type=jnp.float32)
    o_ref[...] = (y + b_ref[...]).astype(o_ref.dtype)


def _vmem_capacity_bytes():
    """Physical VMEM of the current generation (64 MiB on v7x, 128 MiB on
    v5e/v6e); conservative v7x fallback if the query is unavailable."""
    try:
        cap = int(pltpu.get_tpu_info().vmem_capacity_bytes)
        if cap > 0:
            return cap
    except Exception:
        pass
    return 64 * 1024 * 1024


def _round_down_128(n):
    return max(128, (n // 128) * 128)


def _pick_lane_tile(c_in, c_out, in_itemsize, out_itemsize, vmem_budget,
                    max_tl=2048):
    """Largest multiple-of-128 lane tile <= max_tl whose double-buffered in+out
    tiles plus (double-buffered) resident weight/bias fit `vmem_budget`."""
    tl = max_tl
    while tl > 128:
        working = (2 * tl * (c_in * in_itemsize + c_out * out_itemsize)
                   + 2 * c_in * c_out * in_itemsize + 2 * c_out * 4)
        if working <= vmem_budget:
            break
        tl -= 128
    return max(tl, 128)


@partial(jax.jit, static_argnames=("stride", "padding", "compute_dtype"))
def pointwise_1d_conv(x, weight, bias, *, stride=1, padding=1, compute_dtype=None):
    """Equivalent of nn.Conv1d(C_in, C_out, kernel_size=1, stride, padding, bias=True).

    x:      (B, C_in, L)
    weight: (C_out, C_in, 1)
    bias:   (C_out,)
    returns (B, C_out, (L + 2*padding - 1)//stride + 1)
    """
    B, C_in, L = x.shape
    C_out = weight.shape[0]
    out_dtype = x.dtype
    cdt = jnp.dtype(compute_dtype) if compute_dtype is not None else jnp.dtype(x.dtype)

    L_out = (L + 2 * padding - 1) // stride + 1

    # ---- Input selection: pad / strided-slice only, NO gather ---------------
    # kernel_size == 1  =>  y[b, :, j] = W @ x[b, :, j*stride - padding] + bias,
    # with out-of-range (zero-padded) positions producing exactly `bias`.
    # Materializing the conv zero-padding with jnp.pad turns this into a pure
    # position-aligned matmul; for the default stride=1 that single pad is the
    # ONLY extra HBM pass left in the wrapper.
    if padding == 0 and stride == 1:
        x_sel = x                                                  # zero-copy
    else:
        xp = jnp.pad(x, ((0, 0), (0, 0), (padding, padding)))
        if stride == 1:
            x_sel = xp                                             # (B, C_in, L_out)
        else:
            # TODO(synk): stride>1 could instead use an in-kernel strided read
            # (ref[:, pl.ds(0, TL, stride=stride)]) to avoid this slice copy.
            x_sel = jax.lax.slice(
                xp, (0, 0, 0), (B, C_in, (L_out - 1) * stride + 1),
                (1, 1, stride))                                    # (B, C_in, L_out)
    if x_sel.dtype != cdt:
        x_sel = x_sel.astype(cdt)

    w2d = weight.reshape(C_out, C_in).astype(cdt)
    b2d = bias.reshape(C_out, 1).astype(jnp.float32)

    in_itemsize = jnp.dtype(cdt).itemsize
    out_itemsize = jnp.dtype(out_dtype).itemsize

    # Generation-aware VMEM budgeting: ~40% of physical VMEM for the pipelined
    # working set; explicit scoped-VMEM limit with headroom for compiler scratch.
    vmem_cap = _vmem_capacity_bytes()
    budget = (4 * vmem_cap) // 10
    vmem_limit = (3 * vmem_cap) // 4

    # TODO(synk): pipeline_mode=pl.Buffered(1) on the weight/bias specs would
    # drop their second buffer for very large C_in*C_out (matters on v7x VMEM).

    if L_out >= 128:
        # ---- Main path: native layout, 2-D (batch, length-tile) grid. -------
        # No input transpose, no output transpose: the kernel writes directly
        # into (B, C_out, L_out). Lane tiles are >=128 wide (unmasked vst);
        # the ragged last tile is masked by Pallas (columns are independent).
        TL = _pick_lane_tile(C_in, C_out, in_itemsize, out_itemsize, budget)
        TL = min(TL, _round_down_128(L_out))
        n_tiles = pl.cdiv(L_out, TL)
        if B * n_tiles < 2 and TL > 128:
            # v7x megacore: make sure there are >=2 parallel grid steps.
            TL = _round_down_128(TL // 2)
            n_tiles = pl.cdiv(L_out, TL)
        return pl.pallas_call(
            pointwise_conv_kernel,
            out_shape=jax.ShapeDtypeStruct((B, C_out, L_out), out_dtype),
            grid=(B, n_tiles),
            in_specs=[
                pl.BlockSpec((C_out, C_in), lambda b, i: (0, 0)),      # weight
                pl.BlockSpec((C_out, 1), lambda b, i: (0, 0)),         # bias
                pl.BlockSpec((None, C_in, TL), lambda b, i: (b, 0, i)),
            ],
            out_specs=pl.BlockSpec((None, C_out, TL), lambda b, i: (b, 0, i)),
            compiler_params=pltpu.CompilerParams(
                dimension_semantics=("parallel", "parallel"),
                vmem_limit_bytes=vmem_limit,
            ),
        )(w2d, b2d, x_sel)

    # ---- Fallback (L_out < 128): collapse batch into the lane axis so tiles
    # stay lane-dense. The transpose passes only touch small arrays here.
    x2d = jnp.transpose(x_sel, (1, 0, 2)).reshape(C_in, B * L_out)
    N = B * L_out
    n128 = ((N + 127) // 128) * 128
    TL = _pick_lane_tile(C_in, C_out, in_itemsize, out_itemsize, budget)
    TL = min(TL, n128)
    if n128 >= 256 and TL > n128 // 2:
        # v7x megacore: keep >=2 grid steps.
        TL = _round_down_128(n128 // 2)
    N_pad = ((N + TL - 1) // TL) * TL
    if N_pad != N:
        # Zero columns -> exactly `bias` in the output; sliced off below.
        x2d = jnp.pad(x2d, ((0, 0), (0, N_pad - N)))
    y2d = pl.pallas_call(
        pointwise_conv_kernel,
        out_shape=jax.ShapeDtypeStruct((C_out, N_pad), out_dtype),
        grid=(N_pad // TL,),
        in_specs=[
            pl.BlockSpec((C_out, C_in), lambda i: (0, 0)),             # weight
            pl.BlockSpec((C_out, 1), lambda i: (0, 0)),                # bias
            pl.BlockSpec((C_in, TL), lambda i: (0, i)),                # x tile
        ],
        out_specs=pl.BlockSpec((C_out, TL), lambda i: (0, i)),
        compiler_params=pltpu.CompilerParams(
            dimension_semantics=("parallel",),
            vmem_limit_bytes=vmem_limit,
        ),
    )(w2d, b2d, x2d)
    y = y2d[:, :N].reshape(C_out, B, L_out)
    return jnp.transpose(y, (1, 0, 2))


def _ref_conv(x, weight, bias, stride, padding):
    """Pure-JAX reference of nn.Conv1d(kernel_size=1, stride, padding)."""
    xp = jnp.pad(x, ((0, 0), (0, 0), (padding, padding)))
    y = jnp.einsum("oi,bil->bol", weight[:, :, 0], xp) + bias[None, :, None]
    return y[:, :, ::stride]


if __name__ == "__main__":
    key = jax.random.PRNGKey(0)
    kx, kw, kb, kx2 = jax.random.split(key, 4)

    # Module config: pointwise conv, defaults stride=1, padding=1, bias=True.
    B, C_in, C_out = 2, 16, 32
    # Deterministic init mimicking PyTorch Conv1d default: U(-sqrt(k), sqrt(k)),
    # k = 1/(C_in * kernel_size).
    bound = 1.0 / jnp.sqrt(jnp.float32(C_in * 1))
    weight = jax.random.uniform(kw, (C_out, C_in, 1), jnp.float32, -bound, bound)
    bias = jax.random.uniform(kb, (C_out,), jnp.float32, -bound, bound)

    # 1) Short sequence (L_out < 128) -> batch-collapsed fallback path.
    L = 16
    x = jax.random.normal(kx, (B, C_in, L), dtype=jnp.float32)
    out = jax.block_until_ready(pointwise_1d_conv(x, weight, bias, stride=1, padding=1))
    ref = _ref_conv(x, weight, bias, 1, 1)
    assert out.shape == ref.shape == (B, C_out, L + 2), out.shape
    assert jnp.allclose(out, ref, atol=1e-4, rtol=1e-4)

    out_s2 = jax.block_until_ready(pointwise_1d_conv(x, weight, bias, stride=2, padding=1))
    ref_s2 = _ref_conv(x, weight, bias, 2, 1)
    assert out_s2.shape == ref_s2.shape, out_s2.shape
    assert jnp.allclose(out_s2, ref_s2, atol=1e-4, rtol=1e-4)

    # 2) Longer sequence (L_out >= 128) -> native-layout main path (no transposes).
    L2 = 256
    x2 = jax.random.normal(kx2, (B, C_in, L2), dtype=jnp.float32)
    out2 = jax.block_until_ready(pointwise_1d_conv(x2, weight, bias, stride=1, padding=1))
    ref2 = _ref_conv(x2, weight, bias, 1, 1)
    assert out2.shape == ref2.shape == (B, C_out, L2 + 2), out2.shape
    assert jnp.allclose(out2, ref2, atol=1e-4, rtol=1e-4)

    out2_s2 = jax.block_until_ready(pointwise_1d_conv(x2, weight, bias, stride=2, padding=1))
    ref2_s2 = _ref_conv(x2, weight, bias, 2, 1)
    assert out2_s2.shape == ref2_s2.shape, out2_s2.shape
    assert jnp.allclose(out2_s2, ref2_s2, atol=1e-4, rtol=1e-4)

    # 3) bf16 streaming (HBM-bound op -> halve bytes moved), f32 accumulation.
    out2_bf16 = jax.block_until_ready(
        pointwise_1d_conv(x2, weight, bias, stride=1, padding=1,
                          compute_dtype=jnp.bfloat16))
    assert out2_bf16.shape == ref2.shape
    assert jnp.allclose(out2_bf16, ref2, atol=1e-1, rtol=5e-2)

    print("KERNEL_OK")
</pallas_src>

<mosaic_0001>
module attributes {stable_mosaic.version = 11 : i64} {
  func.func @pointwise_conv_kernel(%arg0: i32, %arg1: memref<32x16xf32, #tpu.memory_space<vmem>>, %arg2: memref<32x1xf32, #tpu.memory_space<vmem>>, %arg3: memref<16x128xf32, #tpu.memory_space<vmem>>, %arg4: memref<32x128xf32, #tpu.memory_space<vmem>>) attributes {dimension_semantics = [#tpu.dimension_semantics<parallel>], iteration_bounds = array<i64: 1>, scalar_prefetch = 0 : i64, scratch_operands = 0 : i64, tpu.core_type = #tpu.core_type<tc>, window_params = [{pipeline_mode = #tpu.pipeline_mode<synchronous>, transform_indices = @transform_0, window_bounds = array<i64: 32, 16>}, {pipeline_mode = #tpu.pipeline_mode<synchronous>, transform_indices = @transform_1, window_bounds = array<i64: 32, 1>}, {transform_indices = @transform_2, window_bounds = array<i64: 16, 128>}, {transform_indices = @transform_3, window_bounds = array<i64: 32, 128>}]} {
    %c0 = arith.constant 0 : index
    %c0_0 = arith.constant 0 : index
    %0 = vector.load %arg1[%c0, %c0_0] : memref<32x16xf32, #tpu.memory_space<vmem>>, vector<32x16xf32>
    %c0_1 = arith.constant 0 : index
    %c0_2 = arith.constant 0 : index
    %1 = vector.load %arg3[%c0_1, %c0_2] : memref<16x128xf32, #tpu.memory_space<vmem>>, vector<16x128xf32>
    %cst = arith.constant dense<0.000000e+00> : vector<32x128xf32>
    %2 = tpu.matmul %0, %1, %cst {dimension_numbers = #tpu.dot_dimension_numbers<[1], [0], [0], [1], [0, 0, 1, 1], [], []>} : vector<32x16xf32>, vector<16x128xf32>, vector<32x128xf32> -> vector<32x128xf32>
    %c0_3 = arith.constant 0 : index
    %c0_4 = arith.constant 0 : index
    %3 = vector.load %arg2[%c0_3, %c0_4] : memref<32x1xf32, #tpu.memory_space<vmem>>, vector<32x1xf32>
    %4 = vector.broadcast %3 : vector<32x1xf32> to vector<32x128xf32>
    %5 = arith.addf %2, %4 : vector<32x128xf32>
    %c0_5 = arith.constant 0 : index
    %c0_6 = arith.constant 0 : index
    %6 = vector.load %arg4[%c0_5, %c0_6] : memref<32x128xf32, #tpu.memory_space<vmem>>, vector<32x128xf32>
    tpu.vector_store %arg4[%c0_5, %c0_6], %5 {strides = array<i32>} : memref<32x128xf32, #tpu.memory_space<vmem>>, vector<32x128xf32>,
    return
  }
  func.func @transform_0(%arg0: i32) -> (i32, i32) {
    %c0_i32 = arith.constant 0 : i32
    %c0_i32_0 = arith.constant 0 : i32
    %c0_i32_1 = arith.constant 0 : i32
    return %c0_i32, %c0_i32_0 : i32, i32
  }
  func.func @transform_1(%arg0: i32) -> (i32, i32) {
    %c0_i32 = arith.constant 0 : i32
    %c0_i32_0 = arith.constant 0 : i32
    %c0_i32_1 = arith.constant 0 : i32
    return %c0_i32, %c0_i32_0 : i32, i32
  }
  func.func @transform_2(%arg0: i32) -> (i32, i32) {
    %c0_i32 = arith.constant 0 : i32
    %c0_i32_0 = arith.constant 0 : i32
    return %c0_i32, %arg0 : i32, i32
  }
  func.func @transform_3(%arg0: i32) -> (i32, i32) {
    %c0_i32 = arith.constant 0 : i32
    %c0_i32_0 = arith.constant 0 : i32
    return %c0_i32, %arg0 : i32, i32
  }
}

</mosaic_0001>

<llo_original>
// kernel: pointwise_1d_conv.1
$region0: #{pointwise_1d_conv.1}
  #allocation0 [shape = 'u32[]', space=smem, size = 0x4, offset = 0x4, fixed_abs, tag = 'smem constant byte address 0x4 - core index']
  #allocation1 [shape = 'u32[144,128]{1,0:T(1,128)}', space=vmem, size = 0x12000, scoped, tag = 'internal scratch']
  %s0 = inlined_call_operand.vmem [shape: f32[32,16], index: 0, kind: input, shape index: {}]
  %s1 = inlined_call_operand.vmem [shape: f32[32,1], index: 1, kind: input, shape index: {}]
  %s2 = inlined_call_operand.vmem [shape: f32[16,128], index: 2, kind: input, shape index: {}]
  %s3 = inlined_call_operand.vmem [shape: f32[32,128], index: 3, kind: output, shape index: {}]
  %s4 = sld [smem:[#allocation0]]
  $region22: #{pointwise_1d_conv.1} parent=0
    _
  %s6 = ssub.s32 1, %s4
  %s7 = scalar_select 0, %s6, %s4
  // Predicated region
  $region2: #{pointwise_1d_conv.1} parent=0 // pred_check
    _
  $region3: #{pointwise_1d_conv.1} parent=0 // pred_check_branch
    %9 = sbr.rel (0) target = $region5
  $region4: #{pointwise_1d_conv.1} parent=0 // pred_region
    _
  $region5: #{pointwise_1d_conv.1} parent=0 // pred_fallthru
    _
  // Predicated region
  $region6: #{pointwise_1d_conv.1} parent=0 // pred_check
    _
  $region7: #{pointwise_1d_conv.1} parent=0 // pred_check_branch
    %11 = sbr.rel (0) target = $region9
  $region8: #{pointwise_1d_conv.1} parent=0 // pred_region
    _
  $region9: #{pointwise_1d_conv.1} parent=0 // pred_fallthru
    _
  // Predicated region
  $region10: #{pointwise_1d_conv.1} parent=0 // pred_check
    _
  $region11: #{pointwise_1d_conv.1} parent=0 // pred_check_branch
    %13 = sbr.rel (0) target = $region13
  $region12: #{pointwise_1d_conv.1} parent=0 // pred_region
    _
  $region13: #{pointwise_1d_conv.1} parent=0 // pred_fallthru
    _
  %v14 = vld [vmem:[%s0] sm:$0xff]
  %v15 = vld [vmem:[%s0 + $0x8] sm:$0xff]
  %v16 = vld [vmem:[%s0 + $0x10] sm:$0xff]
  %v17 = vld [vmem:[%s0 + $0x18] sm:$0xff]
  %v18 = vld [vmem:[%s2] sm:$0xff]
  %v19 = vld [vmem:[%s2 + $0x8] sm:$0xff]
  %v20 = vld [vmem:[%s1] sm:$0xff]
  %v21 = vld [vmem:[%s1 + $0x8] sm:$0xff]
  %v22 = vld [vmem:[%s1 + $0x10] sm:$0xff]
  %v23 = vld [vmem:[%s1 + $0x18] sm:$0xff]
  %25 = vset.pattern.permute.xlu0 0
  %26 = vperm.xlu0 %25, %v20
  %v27 = vpop.permute.xlu0 %26
  %30 = vset.pattern.permute.xlu0 0
  %31 = vperm.xlu0 %30, %v21
  %v32 = vpop.permute.xlu0 %31
  %35 = vset.pattern.permute.xlu0 0
  %36 = vperm.xlu0 %35, %v22
  %v37 = vpop.permute.xlu0 %36
  %40 = vset.pattern.permute.xlu0 0
  %41 = vperm.xlu0 %40, %v23
  %v42 = vpop.permute.xlu0 %41
  %vm44 = vcmask 130048
  %v46 = vsel %vm44, %v14, 0
  %v49 = vsel %vm44, %v15, 0
  %v52 = vsel %vm44, %v16, 0
  %v55 = vsel %vm44, %v17, 0
  %57 = vmatprep.subr.mxu0 0.0
  %58 = vmatpush1.msra.mxu0 %v18
  %59 = vmatprep.subr.mxu0 0.0
  %60 = vmatpush1.msra.mxu0 %v19
  %61 = vmatprep.subr.mxu0 0.0
  %62 = vmatpush1.msra.mxu0 0.0
  %63 = vmatprep.subr.mxu0 0.0
  %64 = vmatpush1.msra.mxu0 0.0
  %65 = vmatprep.subr.mxu0 0.0
  %66 = vmatpush1.msra.mxu0 0.0
  %67 = vmatprep.subr.mxu0 0.0
  %68 = vmatpush1.msra.mxu0 0.0
  %69 = vmatprep.subr.mxu0 0.0
  %70 = vmatpush1.msra.mxu0 0.0
  %71 = vmatprep.subr.mxu0 0.0
  %72 = vmatpush1.msra.mxu0 0.0
  %73 = vmatprep.subr.mxu0 0.0
  %74 = vmatpush1.msra.mxu0 0.0
  %75 = vmatprep.subr.mxu0 0.0
  %76 = vmatpush1.msra.mxu0 0.0
  %77 = vmatprep.subr.mxu0 0.0
  %78 = vmatpush1.msra.mxu0 0.0
  %79 = vmatprep.subr.mxu0 0.0
  %80 = vmatpush1.msra.mxu0 0.0
  %81 = vmatprep.subr.mxu0 0.0
  %82 = vmatpush1.msra.mxu0 0.0
  %83 = vmatprep.subr.mxu0 0.0
  %84 = vmatpush1.msra.mxu0 0.0
  %85 = vmatprep.subr.mxu0 0.0
  %86 = vmatpush1.msra.mxu0 0.0
  %87 = vmatprep.subr.mxu0 0.0
  %88 = vmatpush1.msra.mxu0 0.0
  %89 = vmatprep.subr.mxu0 0.0
  %90 = vmatpush1.msra.mxu0 0.0
  %91 = vmatprep.subr.mxu0 0.0
  %92 = vmatpush1.msra.mxu0 0.0
  %93 = vmatprep.subr.mxu0 0.0
  %94 = vmatpush1.msra.mxu0 0.0
  %95 = vmatprep.subr.mxu0 0.0
  %96 = vmatpush1.msra.mxu0 0.0
  %97 = vmatprep.subr.mxu0 0.0
  %98 = vmatpush1.msra.mxu0 0.0
  %99 = vmatprep.subr.mxu0 0.0
  %100 = vmatpush1.msra.mxu0 0.0
  %101 = vmatprep.subr.mxu0 0.0
  %102 = vmatpush1.msra.mxu0 0.0
  %103 = vmatprep.subr.mxu0 0.0
  %104 = vmatpush1.msra.mxu0 0.0
  %105 = vmatprep.subr.mxu0 0.0
  %106 = vmatpush1.msra.mxu0 0.0
  %107 = vmatprep.subr.mxu0 0.0
  %108 = vmatpush1.msra.mxu0 0.0
  %109 = vmatprep.subr.mxu0 0.0
  %110 = vmatpush1.msra.mxu0 0.0
  %111 = vmatprep.subr.mxu0 0.0
  %112 = vmatpush1.msra.mxu0 0.0
  %113 = vmatprep.subr.mxu0 0.0
  %114 = vmatpush1.msra.mxu0 0.0
  %115 = vmatprep.subr.mxu0 0.0
  %116 = vmatpush1.msra.mxu0 0.0
  %117 = vmatprep.subr.mxu0 0.0
  %118 = vmatpush1.msra.mxu0 0.0
  %119 = vmatprep.subr.mxu0 0.0
  %120 = vmatpush1.msra.mxu0 0.0
  %121 = vmatprep.mubr.f32.mxu0 0.0
  %122 = vmatmul.mubr.f32.gmra.mrb[0].mxu0 %v46
  %v123 = vpop.f32.mrb[0].mxu0
  %v124 = vadd.f32 %v27, %v123
  %v125 = vpop.f32.mrb[0].mxu0
  %126 = vmatprep.mubr.f32.mxu0 0.0
  %127 = vmatmul.mubr.f32.gmra.mrb[0].mxu0 %v49
  %v128 = vpop.f32.mrb[0].mxu0
  %v129 = vadd.f32 %v32, %v128
  %v130 = vpop.f32.mrb[0].mxu0
  %131 = vmatprep.mubr.f32.mxu0 0.0
  %132 = vmatmul.mubr.f32.gmra.mrb[0].mxu0 %v52
  %v133 = vpop.f32.mrb[0].mxu0
  %v134 = vadd.f32 %v37, %v133
  %v135 = vpop.f32.mrb[0].mxu0
  %136 = vmatprep.mubr.f32.mxu0 0.0
  %137 = vmatmul.mubr.f32.gmra.mrb[0].mxu0 %v55
  %v138 = vpop.f32.mrb[0].mxu0
  %v139 = vadd.f32 %v42, %v138
  %v140 = vpop.f32.mrb[0].mxu0
  %141 = vdwg.mxu0
  %142 = vst [vmem:[%s3] sm:$0xff] %v124
  %143 = vst [vmem:[%s3 + $0x8] sm:$0xff] %v129
  %144 = vst [vmem:[%s3 + $0x10] sm:$0xff] %v134
  %145 = vst [vmem:[%s3 + $0x18] sm:$0xff] %v139
  // Predicated region
  $region14: #{pointwise_1d_conv.1} parent=0 // pred_check
    _
  $region15: #{pointwise_1d_conv.1} parent=0 // pred_check_branch
    %147 = sbr.rel (0) target = $region17
  $region16: #{pointwise_1d_conv.1} parent=0 // pred_region
    _
  $region17: #{pointwise_1d_conv.1} parent=0 // pred_fallthru
    _
  // Predicated region
  $region18: #{pointwise_1d_conv.1} parent=0 // pred_check
    _
  $region19: #{pointwise_1d_conv.1} parent=0 // pred_check_branch
    %149 = sbr.rel (0) target = $region21
  $region20: #{pointwise_1d_conv.1} parent=0 // pred_region
    _
  $region21: #{pointwise_1d_conv.1} parent=0 // pred_fallthru
    _

</llo_original>
